<compile_context>
chip_gen: v6e
topology: v6e:2x2x1
jax: 0.10.0
libtpu: 0.0.40
codegen_flags: <defaults>
</compile_context>

<pallas_src>
import jax
import jax.numpy as jnp
from jax.experimental import pallas as pl

P_DROP = 0.05
# keep iff bits >= THRESH  ->  P(drop) = THRESH / 2^32 == P_DROP (to 1 ulp)
_DROP_THRESH = int(round(P_DROP * (1 << 32)))
# (1 / (1 - p)) ** 3 : dropout keep-scale folded through the outer cube
_KEEP_SCALE_CUBED = (1.0 / (1.0 - P_DROP)) ** 3


def _model_kernel(x_ref, mi_ref, bits_ref, o_ref):
    x = x_ref[...]
    mi = mi_ref[...]
    bits = bits_ref[...]

    # t1 = x + model_input ; t3 = t1 ** 3
    t1 = x + mi
    t1_sq = t1 * t1
    t3 = t1_sq * t1

    # t5 = dropout(t3, p)^3 + model_input
    #    = where(keep, t3^3 * (1/(1-p))^3, 0) + model_input
    t3_sq = t3 * t3
    t3_cu = t3_sq * t3
    keep = bits >= jnp.uint32(_DROP_THRESH)
    dropped_cubed = jnp.where(
        keep, t3_cu * jnp.float32(_KEEP_SCALE_CUBED), jnp.float32(0.0)
    )
    o_ref[...] = dropped_cubed + mi


def _reference(x2d, mi2d, bits):
    # Pure-jnp reference with identical RNG bits (for a self-check only).
    t1 = x2d + mi2d
    t3 = t1 ** 3
    keep = bits >= jnp.uint32(_DROP_THRESH)
    d1 = jnp.where(keep, t3 / (1.0 - P_DROP), 0.0)
    return d1 ** 3 + mi2d


def model_forward(x, model_input, key):
    assert x.shape == model_input.shape
    orig_shape = x.shape
    total = 1
    for d in orig_shape:
        total *= d

    # Single-vreg layout: (1, total) -> 1 sublane x `total` lanes (40 <= 128).
    x2d = x.reshape(1, total).astype(jnp.float32)
    mi2d = model_input.reshape(1, total).astype(jnp.float32)
    # Dropout randomness generated with jax.random (portable across TPU and
    # interpret mode); deterministic given `key`.
    bits = jax.random.bits(key, (1, total), dtype=jnp.uint32)

    out2d = pl.pallas_call(
        _model_kernel,
        out_shape=jax.ShapeDtypeStruct((1, total), jnp.float32),
        in_specs=[
            pl.BlockSpec((1, total), lambda: (0, 0)),  # x
            pl.BlockSpec((1, total), lambda: (0, 0)),  # model_input
            pl.BlockSpec((1, total), lambda: (0, 0)),  # dropout random bits
        ],
        out_specs=pl.BlockSpec((1, total), lambda: (0, 0)),
    )(x2d, mi2d, bits)

    return out2d.reshape(orig_shape), (x2d, mi2d, bits, out2d)


if __name__ == "__main__":
    key = jax.random.PRNGKey(0)
    kx, km, kd = jax.random.split(key, 3)
    # Shapes implied by the module: (10, 2, 2)
    x = jax.random.normal(kx, (10, 2, 2), dtype=jnp.float32)
    model_input = jax.random.normal(km, (10, 2, 2), dtype=jnp.float32)

    out, (x2d, mi2d, bits, out2d) = model_forward(x, model_input, kd)
    out = jax.block_until_ready(out)

    assert out.shape == (10, 2, 2)
    assert out.dtype == jnp.float32
    assert bool(jnp.all(jnp.isfinite(out)))

    # Self-check against a pure-jnp reference that uses the same RNG bits.
    ref = _reference(x2d, mi2d, bits)
    assert bool(jnp.allclose(out2d, ref, rtol=1e-5, atol=1e-5))

    print("KERNEL_OK")
</pallas_src>

<mosaic_0001>
module attributes {stable_mosaic.version = 11 : i64} {
  func.func @_model_kernel(%arg0: memref<1x40xf32, #tpu.memory_space<vmem>>, %arg1: memref<1x40xf32, #tpu.memory_space<vmem>>, %arg2: memref<1x40xi32, #tpu.memory_space<vmem>>, %arg3: memref<1x40xf32, #tpu.memory_space<vmem>>) attributes {dimension_semantics = [], scalar_prefetch = 0 : i64, scratch_operands = 0 : i64, tpu.core_type = #tpu.core_type<tc>} {
    %c0 = arith.constant 0 : index
    %c0_0 = arith.constant 0 : index
    %0 = vector.load %arg0[%c0, %c0_0] : memref<1x40xf32, #tpu.memory_space<vmem>>, vector<1x40xf32>
    %c0_1 = arith.constant 0 : index
    %c0_2 = arith.constant 0 : index
    %1 = vector.load %arg1[%c0_1, %c0_2] : memref<1x40xf32, #tpu.memory_space<vmem>>, vector<1x40xf32>
    %c0_3 = arith.constant 0 : index
    %c0_4 = arith.constant 0 : index
    %2 = vector.load %arg2[%c0_3, %c0_4] : memref<1x40xi32, #tpu.memory_space<vmem>>, vector<1x40xi32>
    %3 = arith.addf %0, %1 : vector<1x40xf32>
    %4 = arith.mulf %3, %3 : vector<1x40xf32>
    %5 = arith.mulf %4, %3 : vector<1x40xf32>
    %6 = arith.mulf %5, %5 : vector<1x40xf32>
    %7 = arith.mulf %6, %5 : vector<1x40xf32>
    %c214748365_i32 = arith.constant 214748365 : i32
    %8 = vector.broadcast %c214748365_i32 : i32 to vector<1x40xi32>
    %9 = arith.cmpi uge, %2, %8 : vector<1x40xi32>
    %cst = arith.constant 1.16635072 : f32
    %10 = vector.broadcast %cst : f32 to vector<1x40xf32>
    %11 = arith.mulf %7, %10 : vector<1x40xf32>
    %cst_5 = arith.constant 0.000000e+00 : f32
    %12 = vector.broadcast %cst_5 : f32 to vector<1x40xf32>
    %13 = arith.select %9, %11, %12 : vector<1x40xi1>, vector<1x40xf32>
    %14 = arith.addf %13, %1 : vector<1x40xf32>
    %c0_6 = arith.constant 0 : index
    %c0_7 = arith.constant 0 : index
    %15 = vector.load %arg3[%c0_6, %c0_7] : memref<1x40xf32, #tpu.memory_space<vmem>>, vector<1x40xf32>
    tpu.vector_store %arg3[%c0_6, %c0_7], %14 {strides = array<i32>} : memref<1x40xf32, #tpu.memory_space<vmem>>, vector<1x40xf32>,
    return
  }
}

</mosaic_0001>

<llo_original>
// kernel: tpu_custom_call.1
$region0: #{tpu_custom_call.1}
  #allocation0 [shape = 'u32[]', space=smem, size = 0x4, offset = 0x4, fixed_abs, tag = 'smem constant byte address 0x4 - core index']
  #allocation1 [shape = 'u32[144,128]{1,0:T(1,128)}', space=vmem, size = 0x12000, scoped, tag = 'internal scratch']
  %s0 = inlined_call_operand.hbm [shape: f32[1,40], index: 0, kind: input, shape index: {}]
  %s1 = inlined_call_operand.vmem [shape: f32[1,40], index: 1, kind: input, shape index: {}]
  %s2 = inlined_call_operand.vmem [shape: u32[1,40], index: 2, kind: input, shape index: {}]
  %s3 = inlined_call_operand.hbm [shape: f32[1,40], index: 3, kind: output, shape index: {}]
  %s4 = sld [smem:[#allocation0]]
  $region26: #{tpu_custom_call.1} parent=0
    _
  %s6 = ssub.s32 1, %s4
  %s7 = scalar_select 0, %s6, %s4
  $region1: #{tpu_custom_call.1} parent=0
    #allocation2 [shape = 'u8[512]{0}', space=vmem, size = 0x400, scoped, tag = 'input window, operand 0, single buffered']
    #allocation3 [shape = 's32[1]{0}', space=sflag, size = 0x4, scoped, tag = 'scoped memory for tpu_custom_call.1']
    #allocation4 [shape = 's32[1]{0}', space=sflag, size = 0x4, scoped, tag = 'scoped memory for tpu_custom_call.1']
    #allocation5 [shape = 'u8[512]{0}', space=vmem, size = 0x400, scoped, tag = 'output window, operand 0, single buffered']
    %8 = vsyncpa [#allocation3], 0
    %9 = vsyncpa [#allocation4], 0
    // Predicated region
    $region2: #{tpu_custom_call.1} parent=1 // pred_check
      _
    $region3: #{tpu_custom_call.1} parent=1 // pred_check_branch
      %11 = sbr.rel (0) target = $region5
    $region4: #{tpu_custom_call.1} parent=1 // pred_region
      %s13 = ssub.s32 16, 16
      %14 = vsyncadd [#allocation3], %s13
      %s16 = sshll.u32 [#allocation2], 4
      %s17 = int_to_ptr.vmem [resolvable:$true] %s16
      %19 = dma.hbm_to_vmem [thread:$0]  %s0, 16, %s17, [#allocation3]
    $region5: #{tpu_custom_call.1} parent=1 // pred_fallthru
      _
    // Predicated region
    $region6: #{tpu_custom_call.1} parent=1 // pred_check
      _
    $region7: #{tpu_custom_call.1} parent=1 // pred_check_branch
      %21 = sbr.rel (0) target = $region9
    $region8: #{tpu_custom_call.1} parent=1 // pred_region
      _
    $region9: #{tpu_custom_call.1} parent=1 // pred_fallthru
      _
    // Predicated region
    $region10: #{tpu_custom_call.1} parent=1 // pred_check
      _
    $region11: #{tpu_custom_call.1} parent=1 // pred_check_branch
      %23 = sbr.rel (0) target = $region13
    $region12: #{tpu_custom_call.1} parent=1 // pred_region
      _
    $region13: #{tpu_custom_call.1} parent=1 // pred_fallthru
      _
    // Predicated region
    $region14: #{tpu_custom_call.1} parent=1 // pred_check
      _
    $region15: #{tpu_custom_call.1} parent=1 // pred_check_branch
      %25 = sbr.rel (0) target = $region17
    $region16: #{tpu_custom_call.1} parent=1 // pred_region
      %26 = dma.done [#allocation3], 16
    $region17: #{tpu_custom_call.1} parent=1 // pred_fallthru
      _
    %v27 = vld [vmem:[#allocation2] sm:$0x1]
    %v28 = vld [vmem:[%s1] sm:$0x1]
    %v29 = vld [vmem:[%s2] sm:$0x1]
    %v30 = vadd.f32 %v27, %v28
    %v31 = vmul.f32 %v30, %v30
    %v32 = vmul.f32 %v31, %v30
    %v33 = vmul.f32 %v32, %v32
    %v34 = vmul.f32 %v33, %v32
    %vm35 = vcmp.ge.u32.totalorder %v29, 214748365
    %v36 = vmul.f32 %v34, 1.1663507
    %v37 = vsel %vm35, %v36, 0.0
    %v38 = vadd.f32 %v37, %v28
    %vm39 = vcmask 319488
    %40 = vst.msk [vmem:[#allocation5] sm:$0x1] %vm39, %v38
    // Predicated region
    $region18: #{tpu_custom_call.1} parent=1 // pred_check
      _
    $region19: #{tpu_custom_call.1} parent=1 // pred_check_branch
      %42 = sbr.rel (0) target = $region21
    $region20: #{tpu_custom_call.1} parent=1 // pred_region
      %s44 = ssub.s32 16, 16
      %45 = vsyncadd [#allocation4], %s44
      %s47 = sshll.u32 [#allocation5], 4
      %s48 = int_to_ptr.vmem [resolvable:$true] %s47
      %50 = dma.vmem_to_hbm [thread:$0]  %s48, 16, %s3, [#allocation4]
    $region21: #{tpu_custom_call.1} parent=1 // pred_fallthru
      _
    // Predicated region
    $region22: #{tpu_custom_call.1} parent=1 // pred_check
      _
    $region23: #{tpu_custom_call.1} parent=1 // pred_check_branch
      %52 = sbr.rel (0) target = $region25
    $region24: #{tpu_custom_call.1} parent=1 // pred_region
      %53 = dma.done [#allocation4], 16
    $region25: #{tpu_custom_call.1} parent=1 // pred_fallthru
      _
    %54 = vsyncpa [#allocation3], 1
    %55 = vsyncpa [#allocation4], 1

</llo_original>
